<compile_context>
chip_gen: v7x
topology: tpu7x:2x2x1
jax: 0.10.0
libtpu: 0.0.40
codegen_flags: <defaults>
</compile_context>

<pallas_src>
import functools
from typing import Sequence

import jax
import jax.numpy as jnp
from jax.experimental import pallas as pl
from jax.experimental.pallas import tpu as pltpu


def _round_up(x: int, m: int) -> int:
    return ((x + m - 1) // m) * m


def _gather_normalize_kernel(idx_ref, table_ref, out_ref, *, num_experts):
    """One grid step: one-hot MXU gather of tile_b rows + dense L2 normalize.

    idx_ref:   VMEM (tile_b, 1) int32 expert indices for this tile.
    table_ref: VMEM (E_pad, D) embedding table (grid-invariant / resident).
    out_ref:   VMEM (tile_b, D) output slab.
    """
    idx = idx_ref[...]                                            # (tile_b, 1)
    tile_b = idx.shape[0]

    # One-hot gather on the MXU: (tile_b, E) @ (E, D).
    iota = jax.lax.broadcasted_iota(jnp.int32, (tile_b, num_experts), 1)
    one_hot = (iota == idx).astype(table_ref.dtype)               # (tile_b, E)
    rows = jnp.dot(
        one_hot,
        table_ref[...],
        preferred_element_type=jnp.float32,
        precision=jax.lax.Precision.HIGHEST,   # exact gather for f32 tables
    )                                                             # (tile_b, D)

    # F.normalize: row / max(||row||, 1e-12) == row * rsqrt(max(||row||^2, 1e-24))
    sq_sum = jnp.sum(rows * rows, axis=1, keepdims=True)          # (tile_b, 1)
    inv_norm = jax.lax.rsqrt(jnp.maximum(sq_sum, 1e-24))          # EUP slot
    out_ref[...] = (rows * inv_norm).astype(out_ref.dtype)


def _choose_tile_b(batch: int, e_pad: int, d: int,
                   table_bytes: int, itemsize: int) -> int:
    # Conservative per-call VMEM budget that still fits v7x's 32 MiB scoped
    # default (64 MiB physical) after the (possibly double-buffered) resident
    # table, double-buffered output slabs and in-register f32 temps.
    budget = 24 * 1024 * 1024
    avail = max(budget - 2 * table_bytes, 2 * 1024 * 1024)
    per_row = 2 * d * itemsize + 3 * d * 4 + e_pad * 4
    tile_b = avail // max(per_row, 1)
    tile_b = max(8, min(512, (tile_b // 8) * 8))
    tile_b = min(tile_b, _round_up(batch, 8))
    return int(tile_b)


def expert_embeddings_forward(table: jax.Array, indices: jax.Array) -> jax.Array:
    """table: (E, D) embedding weights; indices: (B,) int32 expert ids."""
    E, D = table.shape
    B = int(indices.shape[0])
    itemsize = jnp.dtype(table.dtype).itemsize

    # Pad the expert axis to a sublane multiple; pad rows are zeros and are
    # never selected (one-hot columns for them are always 0).
    E_pad = _round_up(E, 8)
    if E_pad != E:
        table = jnp.pad(table, ((0, E_pad - E), (0, 0)))
    table_bytes = E_pad * D * itemsize

    tile_b = _choose_tile_b(B, E_pad, D, table_bytes, itemsize)
    b_pad = _round_up(B, tile_b)
    grid = (b_pad // tile_b,)

    # Padded tail rows gather expert 0 (valid), are normalized, then sliced off.
    idx_padded = (
        jnp.zeros((b_pad, 1), dtype=jnp.int32)
        .at[:B, 0]
        .set(indices.astype(jnp.int32))
    )

    # VMEM need: resident table (assume double-buffered) + 2x output slabs +
    # 2x lane-padded index blocks + in-kernel one-hot / f32 temps.
    need = (
        2 * table_bytes
        + 2 * tile_b * D * itemsize
        + 2 * tile_b * 128 * 4
        + tile_b * (E_pad + 2 * D) * 4
    )
    vmem_limit = int(min(56 * 1024 * 1024, max(2 * need, 16 * 1024 * 1024)))

    cost = pl.CostEstimate(
        flops=2 * b_pad * E_pad * D,            # one-hot matmul
        transcendentals=b_pad,                  # rsqrt per row
        bytes_accessed=table_bytes + b_pad * D * itemsize + b_pad * 4,
    )

    out = pl.pallas_call(
        functools.partial(_gather_normalize_kernel, num_experts=E_pad),
        out_shape=jax.ShapeDtypeStruct((b_pad, D), table.dtype),
        grid_spec=pltpu.PrefetchScalarGridSpec(
            num_scalar_prefetch=0,
            grid=grid,
            in_specs=[
                # Per-tile indices as a small VMEM block.
                pl.BlockSpec((tile_b, 1), lambda i: (i, 0)),
                # Whole table resident in VMEM (same block every grid step).
                pl.BlockSpec((E_pad, D), lambda i: (0, 0)),
            ],
            out_specs=pl.BlockSpec((tile_b, D), lambda i: (i, 0)),
        ),
        compiler_params=pltpu.CompilerParams(
            dimension_semantics=("parallel",),
            vmem_limit_bytes=vmem_limit,
        ),
        cost_estimate=cost,
    )(idx_padded, table)

    return out[:B]


class ExpertEmbeddingsPallas:
    """JAX/Pallas port of the PyTorch ExpertEmbeddings module."""

    def __init__(self, model_names: Sequence[str], embedding_dim: int, key):
        self.model_names = list(model_names)
        # nn.Embedding default init: N(0, 1)
        self.weight = jax.random.normal(
            key, (len(self.model_names), embedding_dim), dtype=jnp.float32
        )

    def __getitem__(self, expert_name: str) -> jax.Array:
        return self.weight[self.model_names.index(expert_name)]

    def forward(self, experts: Sequence[str]) -> jax.Array:
        # String -> index lookup is host-side Python (no Pallas equivalent).
        expert_indices = jnp.asarray(
            [self.model_names.index(name) for name in experts], dtype=jnp.int32
        )
        return expert_embeddings_forward(self.weight, expert_indices)


if __name__ == "__main__":
    key = jax.random.PRNGKey(0)

    model_names = ["expert_a", "expert_b", "expert_c", "expert_d"]
    embedding_dim = 128  # lane-aligned embedding dim
    module = ExpertEmbeddingsPallas(model_names, embedding_dim, key)

    # Batch of 8 expert-name requests (with repeats, exercising the gather).
    experts = [
        "expert_b", "expert_a", "expert_d", "expert_c",
        "expert_a", "expert_d", "expert_b", "expert_b",
    ]

    out = module.forward(experts)
    out = jax.block_until_ready(out)

    # Pure-JAX reference of the PyTorch forward for validation.
    idx = jnp.asarray([model_names.index(n) for n in experts], dtype=jnp.int32)
    emb = module.weight[idx]
    ref = emb / jnp.maximum(
        jnp.sqrt(jnp.sum(emb * emb, axis=1, keepdims=True)), 1e-12
    )

    assert out.shape == (len(experts), embedding_dim)
    assert jnp.allclose(out, ref, atol=2e-5, rtol=2e-5)
    print("KERNEL_OK")
</pallas_src>

<mosaic_0001>
module attributes {stable_mosaic.version = 11 : i64} {
  func.func @_gather_normalize_kernel(%arg0: i32, %arg1: memref<8x1xi32, #tpu.memory_space<vmem>>, %arg2: memref<8x128xf32, #tpu.memory_space<vmem>>, %arg3: memref<8x128xf32, #tpu.memory_space<vmem>>) attributes {dimension_semantics = [#tpu.dimension_semantics<parallel>], iteration_bounds = array<i64: 1>, scalar_prefetch = 0 : i64, scratch_operands = 0 : i64, tpu.core_type = #tpu.core_type<tc>, window_params = [{transform_indices = @transform_0, window_bounds = array<i64: 8, 1>}, {pipeline_mode = #tpu.pipeline_mode<synchronous>, transform_indices = @transform_1, window_bounds = array<i64: 8, 128>}, {transform_indices = @transform_2, window_bounds = array<i64: 8, 128>}]} {
    %c0 = arith.constant 0 : index
    %c0_0 = arith.constant 0 : index
    %0 = vector.load %arg1[%c0, %c0_0] : memref<8x1xi32, #tpu.memory_space<vmem>>, vector<8x1xi32>
    %1 = tpu.iota {dimensions = array<i32: 1>} : vector<8x8xi32>
    %2 = vector.broadcast %0 : vector<8x1xi32> to vector<8x8xi32>
    %3 = arith.cmpi eq, %1, %2 : vector<8x8xi32>
    %4 = arith.extui %3 : vector<8x8xi1> to vector<8x8xi32>
    %5 = arith.sitofp %4 : vector<8x8xi32> to vector<8x8xf32>
    %c0_1 = arith.constant 0 : index
    %c0_2 = arith.constant 0 : index
    %6 = vector.load %arg2[%c0_1, %c0_2] : memref<8x128xf32, #tpu.memory_space<vmem>>, vector<8x128xf32>
    %cst = arith.constant dense<0.000000e+00> : vector<8x128xf32>
    %7 = tpu.matmul %5, %6, %cst {dimension_numbers = #tpu.dot_dimension_numbers<[1], [0], [0], [1], [0, 0, 1, 1], [], []>, precision = #tpu.contract_precision<fp32>} : vector<8x8xf32>, vector<8x128xf32>, vector<8x128xf32> -> vector<8x128xf32>
    %8 = arith.mulf %7, %7 : vector<8x128xf32>
    %cst_3 = arith.constant dense<0.000000e+00> : vector<8xf32>
    %9 = vector.multi_reduction <add>, %8, %cst_3 [1] : vector<8x128xf32> to vector<8xf32>
    %10 = vector.shape_cast %9 : vector<8xf32> to vector<8x1xf32>
    %cst_4 = arith.constant 1.000000e-24 : f32
    %11 = vector.broadcast %cst_4 : f32 to vector<8x1xf32>
    %12 = arith.maximumf %10, %11 : vector<8x1xf32>
    %13 = math.rsqrt %12 : vector<8x1xf32>
    %14 = vector.broadcast %13 : vector<8x1xf32> to vector<8x128xf32>
    %15 = arith.mulf %7, %14 : vector<8x128xf32>
    %c0_5 = arith.constant 0 : index
    %c0_6 = arith.constant 0 : index
    %16 = vector.load %arg3[%c0_5, %c0_6] : memref<8x128xf32, #tpu.memory_space<vmem>>, vector<8x128xf32>
    tpu.vector_store %arg3[%c0_5, %c0_6], %15 {strides = array<i32>} : memref<8x128xf32, #tpu.memory_space<vmem>>, vector<8x128xf32>,
    return
  }
  func.func @transform_0(%arg0: i32) -> (i32, i32) {
    %c0_i32 = arith.constant 0 : i32
    %c0_i32_0 = arith.constant 0 : i32
    return %arg0, %c0_i32 : i32, i32
  }
  func.func @transform_1(%arg0: i32) -> (i32, i32) {
    %c0_i32 = arith.constant 0 : i32
    %c0_i32_0 = arith.constant 0 : i32
    %c0_i32_1 = arith.constant 0 : i32
    return %c0_i32, %c0_i32_0 : i32, i32
  }
  func.func @transform_2(%arg0: i32) -> (i32, i32) {
    %c0_i32 = arith.constant 0 : i32
    %c0_i32_0 = arith.constant 0 : i32
    return %arg0, %c0_i32 : i32, i32
  }
}

</mosaic_0001>

<llo_original>
// kernel: tpu_custom_call.1
$region0: #{tpu_custom_call.1}
  #allocation0 [shape = 'u32[]', space=smem, size = 0x4, offset = 0x4, fixed_abs, tag = 'smem constant byte address 0x4 - core index']
  #allocation1 [shape = 'u32[144,128]{1,0:T(1,128)}', space=vmem, size = 0x12000, scoped, tag = 'internal scratch']
  %s0 = inlined_call_operand.vmem [shape: s32[8,1], index: 0, kind: input, shape index: {}]
  %s1 = inlined_call_operand.vmem [shape: f32[8,128], index: 1, kind: input, shape index: {}]
  %s2 = inlined_call_operand.hbm [shape: f32[8,128], index: 2, kind: output, shape index: {}]
  %s3 = sld [smem:[#allocation0]]
  $region18: #{tpu_custom_call.1} parent=0
    _
  %s5 = ssub.s32 1, %s3
  %s6 = scalar_select 0, %s5, %s3
  $region1: #{tpu_custom_call.1} parent=0
    #allocation2 [shape = 'u8[4096]{0}', space=vmem, size = 0x1000, scoped, tag = 'output window, operand 0, single buffered']
    #allocation3 [shape = 's32[1]{0}', space=sflag, size = 0x4, scoped, tag = 'scoped memory for tpu_custom_call.1']
    %7 = vsyncpa [#allocation3], 0
    // Predicated region
    $region2: #{tpu_custom_call.1} parent=1 // pred_check
      _
    $region3: #{tpu_custom_call.1} parent=1 // pred_check_branch
      %9 = sbr.rel (0) target = $region5
    $region4: #{tpu_custom_call.1} parent=1 // pred_region
      _
    $region5: #{tpu_custom_call.1} parent=1 // pred_fallthru
      _
    // Predicated region
    $region6: #{tpu_custom_call.1} parent=1 // pred_check
      _
    $region7: #{tpu_custom_call.1} parent=1 // pred_check_branch
      %11 = sbr.rel (0) target = $region9
    $region8: #{tpu_custom_call.1} parent=1 // pred_region
      _
    $region9: #{tpu_custom_call.1} parent=1 // pred_fallthru
      _
    %v12 = vld [vmem:[%s0] sm:$0xff]
    %v13 = vlaneseq
    %v14 = vand.u32 %v13, 127
    %15 = vset.pattern.permute.xlu0 0
    %16 = vperm.xlu0 %15, %v12
    %v17 = vpop.permute.xlu0 %16
    %vm18 = vcmp.eq.s32.totalorder %v14, %v17
    %v19 = vsel %vm18, 1, 0
    %v20 = vcvt.s32.f32 %v19
    %v21 = vld [vmem:[%s1] sm:$0xff]
    %vm22 = vcmask 64512
    %v24 = vsel %vm22, %v20, 0
    %26 = vmatprep.subr.mxu0 0.0
    %v27 = vand.u32 %v21, 4294901760
    %28 = vmatpush1.msra.mxu0 %v27
    %29 = vmatprep.subr.mxu0 0.0
    %30 = vmatpush1.msra.mxu0 0.0
    %31 = vmatprep.subr.mxu0 0.0
    %32 = vmatpush1.msra.mxu0 0.0
    %33 = vmatprep.subr.mxu0 0.0
    %34 = vmatpush1.msra.mxu0 0.0
    %35 = vmatprep.subr.mxu0 0.0
    %36 = vmatpush1.msra.mxu0 0.0
    %37 = vmatprep.subr.mxu0 0.0
    %38 = vmatpush1.msra.mxu0 0.0
    %39 = vmatprep.subr.mxu0 0.0
    %40 = vmatpush1.msra.mxu0 0.0
    %41 = vmatprep.subr.mxu0 0.0
    %42 = vmatpush1.msra.mxu0 0.0
    %43 = vmatprep.subr.mxu0 0.0
    %44 = vmatpush1.msra.mxu0 0.0
    %45 = vmatprep.subr.mxu0 0.0
    %46 = vmatpush1.msra.mxu0 0.0
    %47 = vmatprep.subr.mxu0 0.0
    %48 = vmatpush1.msra.mxu0 0.0
    %49 = vmatprep.subr.mxu0 0.0
    %50 = vmatpush1.msra.mxu0 0.0
    %51 = vmatprep.subr.mxu0 0.0
    %52 = vmatpush1.msra.mxu0 0.0
    %53 = vmatprep.subr.mxu0 0.0
    %54 = vmatpush1.msra.mxu0 0.0
    %55 = vmatprep.subr.mxu0 0.0
    %56 = vmatpush1.msra.mxu0 0.0
    %57 = vmatprep.subr.mxu0 0.0
    %58 = vmatpush1.msra.mxu0 0.0
    %59 = vmatprep.subr.mxu0 0.0
    %60 = vmatpush1.msra.mxu0 0.0
    %61 = vmatprep.subr.mxu0 0.0
    %62 = vmatpush1.msra.mxu0 0.0
    %63 = vmatprep.subr.mxu0 0.0
    %64 = vmatpush1.msra.mxu0 0.0
    %65 = vmatprep.subr.mxu0 0.0
    %66 = vmatpush1.msra.mxu0 0.0
    %67 = vmatprep.subr.mxu0 0.0
    %68 = vmatpush1.msra.mxu0 0.0
    %69 = vmatprep.subr.mxu0 0.0
    %70 = vmatpush1.msra.mxu0 0.0
    %71 = vmatprep.subr.mxu0 0.0
    %72 = vmatpush1.msra.mxu0 0.0
    %73 = vmatprep.subr.mxu0 0.0
    %74 = vmatpush1.msra.mxu0 0.0
    %75 = vmatprep.subr.mxu0 0.0
    %76 = vmatpush1.msra.mxu0 0.0
    %77 = vmatprep.subr.mxu0 0.0
    %78 = vmatpush1.msra.mxu0 0.0
    %79 = vmatprep.subr.mxu0 0.0
    %80 = vmatpush1.msra.mxu0 0.0
    %81 = vmatprep.subr.mxu0 0.0
    %82 = vmatpush1.msra.mxu0 0.0
    %83 = vmatprep.subr.mxu0 0.0
    %84 = vmatpush1.msra.mxu0 0.0
    %85 = vmatprep.subr.mxu0 0.0
    %86 = vmatpush1.msra.mxu0 0.0
    %87 = vmatprep.subr.mxu0 0.0
    %88 = vmatpush1.msra.mxu0 0.0
    %89 = vmatprep.subr.mxu0 0.0
    %90 = vmatpush1.msra.mxu0 0.0
    %91 = vmatprep.mubr.f32.mxu0 0.0
    %v92 = vand.u32 %v24, 4294901760
    %v93 = vsub.f32 %v24, %v92
    %v94 = vand.u32 %v93, 4294901760
    %v95 = vsub.f32 %v93, %v94
    %v96 = vand.u32 %v95, 4294901760
    %97 = vmatmul.mubr.f32.gmra.mrb[0].mxu0 %v96
    %v98 = vpop.f32.mrb[0].mxu0
    %v99 = vadd.f32 0.0, %v98
    %v100 = vpop.f32.mrb[0].mxu0
    %101 = vdwg.mxu0
    %102 = vmatprep.subr.mxu0 0.0
    %v103 = vand.u32 %v21, 4294901760
    %v104 = vsub.f32 %v21, %v103
    %v105 = vand.u32 %v104, 4294901760
    %v106 = vsub.f32 %v104, %v105
    %v107 = vand.u32 %v106, 4294901760
    %108 = vmatpush1.msra.mxu0 %v107
    %109 = vmatprep.subr.mxu0 0.0
    %110 = vmatpush1.msra.mxu0 0.0
    %111 = vmatprep.subr.mxu0 0.0
    %112 = vmatpush1.msra.mxu0 0.0
    %113 = vmatprep.subr.mxu0 0.0
    %114 = vmatpush1.msra.mxu0 0.0
    %115 = vmatprep.subr.mxu0 0.0
    %116 = vmatpush1.msra.mxu0 0.0
    %117 = vmatprep.subr.mxu0 0.0
    %118 = vmatpush1.msra.mxu0 0.0
    %119 = vmatprep.subr.mxu0 0.0
    %120 = vmatpush1.msra.mxu0 0.0
    %121 = vmatprep.subr.mxu0 0.0
    %122 = vmatpush1.msra.mxu0 0.0
    %123 = vmatprep.subr.mxu0 0.0
    %124 = vmatpush1.msra.mxu0 0.0
    %125 = vmatprep.subr.mxu0 0.0
    %126 = vmatpush1.msra.mxu0 0.0
    %127 = vmatprep.subr.mxu0 0.0
    %128 = vmatpush1.msra.mxu0 0.0
    %129 = vmatprep.subr.mxu0 0.0
    %130 = vmatpush1.msra.mxu0 0.0
    %131 = vmatprep.subr.mxu0 0.0
    %132 = vmatpush1.msra.mxu0 0.0
    %133 = vmatprep.subr.mxu0 0.0
    %134 = vmatpush1.msra.mxu0 0.0
    %135 = vmatprep.subr.mxu0 0.0
    %136 = vmatpush1.msra.mxu0 0.0
    %137 = vmatprep.subr.mxu0 0.0
    %138 = vmatpush1.msra.mxu0 0.0
    %139 = vmatprep.subr.mxu0 0.0
    %140 = vmatpush1.msra.mxu0 0.0
    %141 = vmatprep.subr.mxu0 0.0
    %142 = vmatpush1.msra.mxu0 0.0
    %143 = vmatprep.subr.mxu0 0.0
    %144 = vmatpush1.msra.mxu0 0.0
    %145 = vmatprep.subr.mxu0 0.0
    %146 = vmatpush1.msra.mxu0 0.0
    %147 = vmatprep.subr.mxu0 0.0
    %148 = vmatpush1.msra.mxu0 0.0
    %149 = vmatprep.subr.mxu0 0.0
    %150 = vmatpush1.msra.mxu0 0.0
    %151 = vmatprep.subr.mxu0 0.0
    %152 = vmatpush1.msra.mxu0 0.0
    %153 = vmatprep.subr.mxu0 0.0
    %154 = vmatpush1.msra.mxu0 0.0
    %155 = vmatprep.subr.mxu0 0.0
    %156 = vmatpush1.msra.mxu0 0.0
    %157 = vmatprep.subr.mxu0 0.0
    %158 = vmatpush1.msra.mxu0 0.0
    %159 = vmatprep.subr.mxu0 0.0
    %160 = vmatpush1.msra.mxu0 0.0
    %161 = vmatprep.subr.mxu0 0.0
    %162 = vmatpush1.msra.mxu0 0.0
    %163 = vmatprep.subr.mxu0 0.0
    %164 = vmatpush1.msra.mxu0 0.0
    %165 = vmatprep.subr.mxu0 0.0
    %166 = vmatpush1.msra.mxu0 0.0
    %167 = vmatprep.subr.mxu0 0.0
    %168 = vmatpush1.msra.mxu0 0.0
    %169 = vmatprep.subr.mxu0 0.0
    %170 = vmatpush1.msra.mxu0 0.0
    %171 = vmatprep.mubr.f32.mxu0 0.0
    %v172 = vand.u32 %v24, 4294901760
    %173 = vmatmul.mubr.f32.gmra.mrb[0].mxu0 %v172
    %v174 = vpop.f32.mrb[0].mxu0
    %v175 = vadd.f32 %v99, %v174
    %v176 = vpop.f32.mrb[0].mxu0
    %177 = vdwg.mxu0
    %178 = vmatprep.subr.mxu0 0.0
    %v179 = vand.u32 %v21, 4294901760
    %v180 = vsub.f32 %v21, %v179
    %181 = vmatpush1.msra.mxu0 %v180
    %182 = vmatprep.subr.mxu0 0.0
    %183 = vmatpush1.msra.mxu0 0.0
    %184 = vmatprep.subr.mxu0 0.0
    %185 = vmatpush1.msra.mxu0 0.0
    %186 = vmatprep.subr.mxu0 0.0
    %187 = vmatpush1.msra.mxu0 0.0
    %188 = vmatprep.subr.mxu0 0.0
    %189 = vmatpush1.msra.mxu0 0.0
    %190 = vmatprep.subr.mxu0 0.0
    %191 = vmatpush1.msra.mxu0 0.0
    %192 = vmatprep.subr.mxu0 0.0
    %193 = vmatpush1.msra.mxu0 0.0
    %194 = vmatprep.subr.mxu0 0.0
    %195 = vmatpush1.msra.mxu0 0.0
    %196 = vmatprep.subr.mxu0 0.0
    %197 = vmatpush1.msra.mxu0 0.0
    %198 = vmatprep.subr.mxu0 0.0
    %199 = vmatpush1.msra.mxu0 0.0
    %200 = vmatprep.subr.mxu0 0.0
    %201 = vmatpush1.msra.mxu0 0.0
    %202 = vmatprep.subr.mxu0 0.0
    %203 = vmatpush1.msra.mxu0 0.0
    %204 = vmatprep.subr.mxu0 0.0
    %205 = vmatpush1.msra.mxu0 0.0
    %206 = vmatprep.subr.mxu0 0.0
    %207 = vmatpush1.msra.mxu0 0.0
    %208 = vmatprep.subr.mxu0 0.0
    %209 = vmatpush1.msra.mxu0 0.0
    %210 = vmatprep.subr.mxu0 0.0
    %211 = vmatpush1.msra.mxu0 0.0
    %212 = vmatprep.subr.mxu0 0.0
    %213 = vmatpush1.msra.mxu0 0.0
    %214 = vmatprep.subr.mxu0 0.0
    %215 = vmatpush1.msra.mxu0 0.0
    %216 = vmatprep.subr.mxu0 0.0
    %217 = vmatpush1.msra.mxu0 0.0
    %218 = vmatprep.subr.mxu0 0.0
    %219 = vmatpush1.msra.mxu0 0.0
    %220 = vmatprep.subr.mxu0 0.0
    %221 = vmatpush1.msra.mxu0 0.0
    %222 = vmatprep.subr.mxu0 0.0
    %223 = vmatpush1.msra.mxu0 0.0
    %224 = vmatprep.subr.mxu0 0.0
    %225 = vmatpush1.msra.mxu0 0.0
    %226 = vmatprep.subr.mxu0 0.0
    %227 = vmatpush1.msra.mxu0 0.0
    %228 = vmatprep.subr.mxu0 0.0
    %229 = vmatpush1.msra.mxu0 0.0
    %230 = vmatprep.subr.mxu0 0.0
    %231 = vmatpush1.msra.mxu0 0.0
    %232 = vmatprep.subr.mxu0 0.0
    %233 = vmatpush1.msra.mxu0 0.0
    %234 = vmatprep.subr.mxu0 0.0
    %235 = vmatpush1.msra.mxu0 0.0
    %236 = vmatprep.subr.mxu0 0.0
    %237 = vmatpush1.msra.mxu0 0.0
    %238 = vmatprep.subr.mxu0 0.0
    %239 = vmatpush1.msra.mxu0 0.0
    %240 = vmatprep.subr.mxu0 0.0
    %241 = vmatpush1.msra.mxu0 0.0
    %242 = vmatprep.subr.mxu0 0.0
    %243 = vmatpush1.msra.mxu0 0.0
    %244 = vmatprep.mubr.f32.mxu0 0.0
    %v245 = vand.u32 %v24, 4294901760
    %v246 = vsub.f32 %v24, %v245
    %247 = vmatmul.mubr.f32.gmra.mrb[0].mxu0 %v246
    %v248 = vpop.f32.mrb[0].mxu0
    %v249 = vadd.f32 %v175, %v248
    %v250 = vpop.f32.mrb[0].mxu0
    %251 = vdwg.mxu0
    %252 = vmatprep.subr.mxu0 0.0
    %v253 = vand.u32 %v21, 4294901760
    %254 = vmatpush1.msra.mxu0 %v253
    %255 = vmatprep.subr.mxu0 0.0
    %256 = vmatpush1.msra.mxu0 0.0
    %257 = vmatprep.subr.mxu0 0.0
    %258 = vmatpush1.msra.mxu0 0.0
    %259 = vmatprep.subr.mxu0 0.0
    %260 = vmatpush1.msra.mxu0 0.0
    %261 = vmatprep.subr.mxu0 0.0
    %262 = vmatpush1.msra.mxu0 0.0
    %263 = vmatprep.subr.mxu0 0.0
    %264 = vmatpush1.msra.mxu0 0.0
    %265 = vmatprep.subr.mxu0 0.0
    %266 = vmatpush1.msra.mxu0 0.0
    %267 = vmatprep.subr.mxu0 0.0
    %268 = vmatpush1.msra.mxu0 0.0
    %269 = vmatprep.subr.mxu0 0.0
    %270 = vmatpush1.msra.mxu0 0.0
    %271 = vmatprep.subr.mxu0 0.0
    %272 = vmatpush1.msra.mxu0 0.0
    %273 = vmatprep.subr.mxu0 0.0
    %274 = vmatpush1.msra.mxu0 0.0
    %275 = vmatprep.subr.mxu0 0.0
    %276 = vmatpush1.msra.mxu0 0.0
    %277 = vmatprep.subr.mxu0 0.0
    %278 = vmatpush1.msra.mxu0 0.0
    %279 = vmatprep.subr.mxu0 0.0
    %280 = vmatpush1.msra.mxu0 0.0
    %281 = vmatprep.subr.mxu0 0.0
    %282 = vmatpush1.msra.mxu0 0.0
    %283 = vmatprep.subr.mxu0 0.0
    %284 = vmatpush1.msra.mxu0 0.0
    %285 = vmatprep.subr.mxu0 0.0
    %286 = vmatpush1.msra.mxu0 0.0
    %287 = vmatprep.subr.mxu0 0.0
    %288 = vmatpush1.msra.mxu0 0.0
    %289 = vmatprep.subr.mxu0 0.0
    %290 = vmatpush1.msra.mxu0 0.0
    %291 = vmatprep.subr.mxu0 0.0
    %292 = vmatpush1.msra.mxu0 0.0
    %293 = vmatprep.subr.mxu0 0.0
    %294 = vmatpush1.msra.mxu0 0.0
    %295 = vmatprep.subr.mxu0 0.0
    %296 = vmatpush1.msra.mxu0 0.0
    %297 = vmatprep.subr.mxu0 0.0
    %298 = vmatpush1.msra.mxu0 0.0
    %299 = vmatprep.subr.mxu0 0.0
    %300 = vmatpush1.msra.mxu0 0.0
    %301 = vmatprep.subr.mxu0 0.0
    %302 = vmatpush1.msra.mxu0 0.0
    %303 = vmatprep.subr.mxu0 0.0
    %304 = vmatpush1.msra.mxu0 0.0
    %305 = vmatprep.subr.mxu0 0.0
    %306 = vmatpush1.msra.mxu0 0.0
    %307 = vmatprep.subr.mxu0 0.0
    %308 = vmatpush1.msra.mxu0 0.0
    %309 = vmatprep.subr.mxu0 0.0
    %310 = vmatpush1.msra.mxu0 0.0
    %311 = vmatprep.subr.mxu0 0.0
    %312 = vmatpush1.msra.mxu0 0.0
    %313 = vmatprep.subr.mxu0 0.0
    %314 = vmatpush1.msra.mxu0 0.0
    %315 = vmatprep.subr.mxu0 0.0
    %316 = vmatpush1.msra.mxu0 0.0
    %317 = vmatprep.mubr.f32.mxu0 0.0
    %v318 = vand.u32 %v24, 4294901760
    %v319 = vsub.f32 %v24, %v318
    %v320 = vand.u32 %v319, 4294901760
    %321 = vmatmul.mubr.f32.gmra.mrb[0].mxu0 %v320
    %v322 = vpop.f32.mrb[0].mxu0
    %v323 = vadd.f32 %v249, %v322
    %v324 = vpop.f32.mrb[0].mxu0
    %325 = vdwg.mxu0
    %326 = vmatprep.subr.mxu0 0.0
    %v327 = vand.u32 %v21, 4294901760
    %v328 = vsub.f32 %v21, %v327
    %v329 = vand.u32 %v328, 4294901760
    %330 = vmatpush1.msra.mxu0 %v329
    %331 = vmatprep.subr.mxu0 0.0
    %332 = vmatpush1.msra.mxu0 0.0
    %333 = vmatprep.subr.mxu0 0.0
    %334 = vmatpush1.msra.mxu0 0.0
    %335 = vmatprep.subr.mxu0 0.0
    %336 = vmatpush1.msra.mxu0 0.0
    %337 = vmatprep.subr.mxu0 0.0
    %338 = vmatpush1.msra.mxu0 0.0
    %339 = vmatprep.subr.mxu0 0.0
    %340 = vmatpush1.msra.mxu0 0.0
    %341 = vmatprep.subr.mxu0 0.0
    %342 = vmatpush1.msra.mxu0 0.0
    %343 = vmatprep.subr.mxu0 0.0
    %344 = vmatpush1.msra.mxu0 0.0
    %345 = vmatprep.subr.mxu0 0.0
    %346 = vmatpush1.msra.mxu0 0.0
    %347 = vmatprep.subr.mxu0 0.0
    %348 = vmatpush1.msra.mxu0 0.0
    %349 = vmatprep.subr.mxu0 0.0
    %350 = vmatpush1.msra.mxu0 0.0
    %351 = vmatprep.subr.mxu0 0.0
    %352 = vmatpush1.msra.mxu0 0.0
    %353 = vmatprep.subr.mxu0 0.0
    %354 = vmatpush1.msra.mxu0 0.0
    %355 = vmatprep.subr.mxu0 0.0
    %356 = vmatpush1.msra.mxu0 0.0
    %357 = vmatprep.subr.mxu0 0.0
    %358 = vmatpush1.msra.mxu0 0.0
    %359 = vmatprep.subr.mxu0 0.0
    %360 = vmatpush1.msra.mxu0 0.0
    %361 = vmatprep.subr.mxu0 0.0
    %362 = vmatpush1.msra.mxu0 0.0
    %363 = vmatprep.subr.mxu0 0.0
    %364 = vmatpush1.msra.mxu0 0.0
    %365 = vmatprep.subr.mxu0 0.0
    %366 = vmatpush1.msra.mxu0 0.0
    %367 = vmatprep.subr.mxu0 0.0
    %368 = vmatpush1.msra.mxu0 0.0
    %369 = vmatprep.subr.mxu0 0.0
    %370 = vmatpush1.msra.mxu0 0.0
    %371 = vmatprep.subr.mxu0 0.0
    %372 = vmatpush1.msra.mxu0 0.0
    %373 = vmatprep.subr.mxu0 0.0
    %374 = vmatpush1.msra.mxu0 0.0
    %375 = vmatprep.subr.mxu0 0.0
    %376 = vmatpush1.msra.mxu0 0.0
    %377 = vmatprep.subr.mxu0 0.0
    %378 = vmatpush1.msra.mxu0 0.0
    %379 = vmatprep.subr.mxu0 0.0
    %380 = vmatpush1.msra.mxu0 0.0
    %381 = vmatprep.subr.mxu0 0.0
    %382 = vmatpush1.msra.mxu0 0.0
    %383 = vmatprep.subr.mxu0 0.0
    %384 = vmatpush1.msra.mxu0 0.0
    %385 = vmatprep.subr.mxu0 0.0
    %386 = vmatpush1.msra.mxu0 0.0
    %387 = vmatprep.subr.mxu0 0.0
    %388 = vmatpush1.msra.mxu0 0.0
    %389 = vmatprep.subr.mxu0 0.0
    %390 = vmatpush1.msra.mxu0 0.0
    %391 = vmatprep.subr.mxu0 0.0
    %392 = vmatpush1.msra.mxu0 0.0
    %393 = vmatprep.mubr.f32.mxu0 0.0
    %v394 = vand.u32 %v24, 4294901760
    %395 = vmatmul.mubr.f32.gmra.mrb[0].mxu0 %v394
    %v396 = vpop.f32.mrb[0].mxu0
    %v397 = vadd.f32 %v323, %v396
    %v398 = vpop.f32.mrb[0].mxu0
    %399 = vdwg.mxu0
    %400 = vmatprep.subr.mxu0 0.0
    %v401 = vand.u32 %v21, 4294901760
    %402 = vmatpush1.msra.mxu0 %v401
    %403 = vmatprep.subr.mxu0 0.0
    %404 = vmatpush1.msra.mxu0 0.0
    %405 = vmatprep.subr.mxu0 0.0
    %406 = vmatpush1.msra.mxu0 0.0
    %407 = vmatprep.subr.mxu0 0.0
    %408 = vmatpush1.msra.mxu0 0.0
    %409 = vmatprep.subr.mxu0 0.0
    %410 = vmatpush1.msra.mxu0 0.0
    %411 = vmatprep.subr.mxu0 0.0
    %412 = vmatpush1.msra.mxu0 0.0
    %413 = vmatprep.subr.mxu0 0.0
    %414 = vmatpush1.msra.mxu0 0.0
    %415 = vmatprep.subr.mxu0 0.0
    %416 = vmatpush1.msra.mxu0 0.0
    %417 = vmatprep.subr.mxu0 0.0
    %418 = vmatpush1.msra.mxu0 0.0
    %419 = vmatprep.subr.mxu0 0.0
    %420 = vmatpush1.msra.mxu0 0.0
    %421 = vmatprep.subr.mxu0 0.0
    %422 = vmatpush1.msra.mxu0 0.0
    %423 = vmatprep.subr.mxu0 0.0
    %424 = vmatpush1.msra.mxu0 0.0
    %425 = vmatprep.subr.mxu0 0.0
    %426 = vmatpush1.msra.mxu0 0.0
    %427 = vmatprep.subr.mxu0 0.0
    %428 = vmatpush1.msra.mxu0 0.0
    %429 = vmatprep.subr.mxu0 0.0
    %430 = vmatpush1.msra.mxu0 0.0
    %431 = vmatprep.subr.mxu0 0.0
    %432 = vmatpush1.msra.mxu0 0.0
    %433 = vmatprep.subr.mxu0 0.0
    %434 = vmatpush1.msra.mxu0 0.0
    %435 = vmatprep.subr.mxu0 0.0
    %436 = vmatpush1.msra.mxu0 0.0
    %437 = vmatprep.subr.mxu0 0.0
    %438 = vmatpush1.msra.mxu0 0.0
    %439 = vmatprep.subr.mxu0 0.0
    %440 = vmatpush1.msra.mxu0 0.0
    %441 = vmatprep.subr.mxu0 0.0
    %442 = vmatpush1.msra.mxu0 0.0
    %443 = vmatprep.subr.mxu0 0.0
    %444 = vmatpush1.msra.mxu0 0.0
    %445 = vmatprep.subr.mxu0 0.0
    %446 = vmatpush1.msra.mxu0 0.0
    %447 = vmatprep.subr.mxu0 0.0
    %448 = vmatpush1.msra.mxu0 0.0
    %449 = vmatprep.subr.mxu0 0.0
    %450 = vmatpush1.msra.mxu0 0.0
    %451 = vmatprep.subr.mxu0 0.0
    %452 = vmatpush1.msra.mxu0 0.0
    %453 = vmatprep.subr.mxu0 0.0
    %454 = vmatpush1.msra.mxu0 0.0
    %455 = vmatprep.subr.mxu0 0.0
    %456 = vmatpush1.msra.mxu0 0.0
    %457 = vmatprep.subr.mxu0 0.0
    %458 = vmatpush1.msra.mxu0 0.0
    %459 = vmatprep.subr.mxu0 0.0
    %460 = vmatpush1.msra.mxu0 0.0
    %461 = vmatprep.subr.mxu0 0.0
    %462 = vmatpush1.msra.mxu0 0.0
    %463 = vmatprep.subr.mxu0 0.0
    %464 = vmatpush1.msra.mxu0 0.0
    %465 = vmatprep.mubr.f32.mxu0 0.0
    %v466 = vand.u32 %v24, 4294901760
    %467 = vmatmul.mubr.f32.gmra.mrb[0].mxu0 %v466
    %v468 = vpop.f32.mrb[0].mxu0
    %v469 = vadd.f32 %v397, %v468
    %v470 = vpop.f32.mrb[0].mxu0
    %471 = vdwg.mxu0
    %v472 = vmul.f32 %v469, %v469
    %473 = vadd.xlane.f32.xlu0 %v472
    %v474 = vpop.xlane.xlu0 %473
    %v475 = vmax.f32 %v474, 1e-24
    %v476 = vrsqrt.pop %v475
    %v477 = vmul.f32 %v469, %v476
    %478 = vst [vmem:[#allocation2] sm:$0xff] %v477
    // Predicated region
    $region10: #{tpu_custom_call.1} parent=1 // pred_check
      _
    $region11: #{tpu_custom_call.1} parent=1 // pred_check_branch
      %480 = sbr.rel (0) target = $region13
    $region12: #{tpu_custom_call.1} parent=1 // pred_region
      %s482 = ssub.s32 128, 128
      %483 = vsyncadd [#allocation3], %s482
      %s485 = sshll.u32 [#allocation2], 4
      %s486 = int_to_ptr.vmem [resolvable:$true] %s485
      %488 = dma.vmem_to_hbm [thread:$0]  %s486, 128, %s2, [#allocation3]
    $region13: #{tpu_custom_call.1} parent=1 // pred_fallthru
      _
    // Predicated region
    $region14: #{tpu_custom_call.1} parent=1 // pred_check
      _
    $region15: #{tpu_custom_call.1} parent=1 // pred_check_branch
      %490 = sbr.rel (0) target = $region17
    $region16: #{tpu_custom_call.1} parent=1 // pred_region
      %491 = dma.done [#allocation3], 128
    $region17: #{tpu_custom_call.1} parent=1 // pred_fallthru
      _
    %492 = vsyncpa [#allocation3], 1

</llo_original>
